<compile_context>
chip_gen: v6e
topology: v6e:2x2x1
jax: 0.10.0
libtpu: 0.0.40
codegen_flags: <defaults>
</compile_context>

<pallas_src>
import functools

import jax
import jax.numpy as jnp
from jax.experimental import pallas as pl
from jax.experimental.pallas import tpu as pltpu

OUT_PAD = 128  # lane-dense output width


def _round_up(x, m):
    return ((x + m - 1) // m) * m


def qnetwork_kernel(x_ref, w1_ref, b1_ref, w2_ref, b2_ref, o_ref):
    # fc1: x @ W1^T + b1  (W1 pre-transposed -> [in, hid]), then ReLU.
    h = jnp.dot(x_ref[...], w1_ref[...], preferred_element_type=jnp.float32)
    h = jnp.maximum(h + b1_ref[...], jnp.float32(0.0))
    # fc2: h @ W2^T + b2  (W2 pre-transposed and zero-padded -> [hid, 128]).
    y = jnp.dot(h, w2_ref[...], preferred_element_type=jnp.float32) + b2_ref[...]
    o_ref[...] = y.astype(o_ref.dtype)


def prepare_params(w1, b1, w2, b2, out_pad=OUT_PAD):
    """One-time parameter packing (PyTorch layout -> kernel layout).

    w1: [hidden, in], b1: [hidden], w2: [out, hidden], b2: [out].
    Returns ((w1_t, b1_2d, w2_t_pad, b2_pad), out_dim).
    """
    hid, _ = w1.shape
    out_dim = w2.shape[0]
    w1_t = jnp.asarray(w1).T                                   # [in, hid]
    b1_2d = jnp.asarray(b1).reshape(1, hid)                    # [1, hid]
    w2_t = jnp.asarray(w2).T                                   # [hid, out]
    w2_t_pad = jnp.zeros((hid, out_pad), w2.dtype).at[:, :out_dim].set(w2_t)
    b2_pad = jnp.zeros((1, out_pad), b2.dtype).at[:, :out_dim].set(
        jnp.asarray(b2).reshape(1, out_dim))
    return (w1_t, b1_2d, w2_t_pad, b2_pad), out_dim


@functools.partial(jax.jit, static_argnames=("out_dim", "max_tile_b"))
def qnetwork_forward(x, params, *, out_dim, max_tile_b=128):
    """x: [B, input_size] -> [B, out_dim]. `params` from prepare_params."""
    w1_t, b1_2d, w2_t_pad, b2_pad = params
    B, in_dim = x.shape
    hid = w1_t.shape[1]
    out_pad = w2_t_pad.shape[1]

    # Batch tiling: tile up to `max_tile_b` rows (sublane-aligned to 8).
    tile_b = min(max_tile_b, _round_up(B, 8))
    b_pad = _round_up(B, tile_b)
    if b_pad != B:
        x = jnp.pad(x, ((0, b_pad - B), (0, 0)))
    grid = (b_pad // tile_b,)

    y_pad = pl.pallas_call(
        qnetwork_kernel,
        out_shape=jax.ShapeDtypeStruct((b_pad, out_pad), x.dtype),
        grid=grid,
        in_specs=[
            pl.BlockSpec((tile_b, in_dim), lambda i: (i, 0)),   # x tile
            pl.BlockSpec((in_dim, hid), lambda i: (0, 0)),      # W1^T (resident)
            pl.BlockSpec((1, hid), lambda i: (0, 0)),           # b1
            pl.BlockSpec((hid, out_pad), lambda i: (0, 0)),     # W2^T padded
            pl.BlockSpec((1, out_pad), lambda i: (0, 0)),       # b2 padded
        ],
        out_specs=pl.BlockSpec((tile_b, out_pad), lambda i: (i, 0)),
        compiler_params=pltpu.CompilerParams(
            dimension_semantics=("parallel",)),
    )(x, w1_t, b1_2d, w2_t_pad, b2_pad)

    return y_pad[:B, :out_dim]


def init_linear_params(key, in_features, out_features):
    """Deterministic init mirroring PyTorch's default nn.Linear init:
       U(-1/sqrt(fan_in), 1/sqrt(fan_in)) for both weight and bias."""
    k_w, k_b = jax.random.split(key)
    bound = 1.0 / jnp.sqrt(jnp.float32(in_features))
    w = jax.random.uniform(k_w, (out_features, in_features),
                           minval=-bound, maxval=bound, dtype=jnp.float32)
    b = jax.random.uniform(k_b, (out_features,),
                           minval=-bound, maxval=bound, dtype=jnp.float32)
    return w, b


if __name__ == "__main__":
    # Blackjack DQN shapes: state = (player_sum, dealer_card, usable_ace) -> 3,
    # hidden = 32, actions = 2 (hit / stick).
    batch, input_size, hidden_size, output_size = 8, 3, 32, 2

    key = jax.random.PRNGKey(0)
    k_x, k_fc1, k_fc2, k_big = jax.random.split(key, 4)

    x = jax.random.normal(k_x, (batch, input_size), dtype=jnp.float32)
    w1, b1 = init_linear_params(k_fc1, input_size, hidden_size)
    w2, b2 = init_linear_params(k_fc2, hidden_size, output_size)

    # One-time parameter packing (transpose / pad hoisted out of the call path).
    params, out_dim = prepare_params(w1, b1, w2, b2)

    out = qnetwork_forward(x, params, out_dim=out_dim)
    out = jax.block_until_ready(out)

    ref = jnp.maximum(x @ w1.T + b1, 0.0) @ w2.T + b2
    assert out.shape == (batch, output_size)
    assert jnp.allclose(out, ref, atol=1e-5, rtol=1e-5)

    # Batched variant (many RL states per call) exercises the batch grid
    # (tile_b=128, grid=(2,), "parallel" axis for v7x megacore sharding).
    x_big = jax.random.normal(k_big, (256, input_size), dtype=jnp.float32)
    out_big = jax.block_until_ready(
        qnetwork_forward(x_big, params, out_dim=out_dim))
    ref_big = jnp.maximum(x_big @ w1.T + b1, 0.0) @ w2.T + b2
    assert out_big.shape == (256, output_size)
    assert jnp.allclose(out_big, ref_big, atol=1e-5, rtol=1e-5)

    print("KERNEL_OK")
</pallas_src>

<mosaic_0001>
module attributes {stable_mosaic.version = 11 : i64} {
  func.func @qnetwork_kernel(%arg0: i32, %arg1: memref<8x3xf32, #tpu.memory_space<vmem>>, %arg2: memref<3x32xf32, #tpu.memory_space<vmem>>, %arg3: memref<1x32xf32, #tpu.memory_space<vmem>>, %arg4: memref<32x128xf32, #tpu.memory_space<vmem>>, %arg5: memref<1x128xf32, #tpu.memory_space<vmem>>, %arg6: memref<8x128xf32, #tpu.memory_space<vmem>>) attributes {dimension_semantics = [#tpu.dimension_semantics<parallel>], iteration_bounds = array<i64: 1>, scalar_prefetch = 0 : i64, scratch_operands = 0 : i64, tpu.core_type = #tpu.core_type<tc>, window_params = [{transform_indices = @transform_0, window_bounds = array<i64: 8, 3>}, {pipeline_mode = #tpu.pipeline_mode<synchronous>, transform_indices = @transform_1, window_bounds = array<i64: 3, 32>}, {pipeline_mode = #tpu.pipeline_mode<synchronous>, transform_indices = @transform_2, window_bounds = array<i64: 1, 32>}, {pipeline_mode = #tpu.pipeline_mode<synchronous>, transform_indices = @transform_3, window_bounds = array<i64: 32, 128>}, {pipeline_mode = #tpu.pipeline_mode<synchronous>, transform_indices = @transform_4, window_bounds = array<i64: 1, 128>}, {transform_indices = @transform_5, window_bounds = array<i64: 8, 128>}]} {
    %c0 = arith.constant 0 : index
    %c0_0 = arith.constant 0 : index
    %0 = vector.load %arg1[%c0, %c0_0] : memref<8x3xf32, #tpu.memory_space<vmem>>, vector<8x3xf32>
    %c0_1 = arith.constant 0 : index
    %c0_2 = arith.constant 0 : index
    %1 = vector.load %arg2[%c0_1, %c0_2] : memref<3x32xf32, #tpu.memory_space<vmem>>, vector<3x32xf32>
    %cst = arith.constant dense<0.000000e+00> : vector<8x32xf32>
    %2 = tpu.matmul %0, %1, %cst {dimension_numbers = #tpu.dot_dimension_numbers<[1], [0], [0], [1], [0, 0, 1, 1], [], []>} : vector<8x3xf32>, vector<3x32xf32>, vector<8x32xf32> -> vector<8x32xf32>
    %c0_3 = arith.constant 0 : index
    %c0_4 = arith.constant 0 : index
    %3 = vector.load %arg3[%c0_3, %c0_4] : memref<1x32xf32, #tpu.memory_space<vmem>>, vector<1x32xf32>
    %4 = vector.broadcast %3 : vector<1x32xf32> to vector<8x32xf32>
    %5 = arith.addf %2, %4 : vector<8x32xf32>
    %cst_5 = arith.constant 0.000000e+00 : f32
    %6 = vector.broadcast %cst_5 : f32 to vector<8x32xf32>
    %7 = arith.maximumf %5, %6 : vector<8x32xf32>
    %c0_6 = arith.constant 0 : index
    %c0_7 = arith.constant 0 : index
    %8 = vector.load %arg4[%c0_6, %c0_7] : memref<32x128xf32, #tpu.memory_space<vmem>>, vector<32x128xf32>
    %cst_8 = arith.constant dense<0.000000e+00> : vector<8x128xf32>
    %9 = tpu.matmul %7, %8, %cst_8 {dimension_numbers = #tpu.dot_dimension_numbers<[1], [0], [0], [1], [0, 0, 1, 1], [], []>} : vector<8x32xf32>, vector<32x128xf32>, vector<8x128xf32> -> vector<8x128xf32>
    %c0_9 = arith.constant 0 : index
    %c0_10 = arith.constant 0 : index
    %10 = vector.load %arg5[%c0_9, %c0_10] : memref<1x128xf32, #tpu.memory_space<vmem>>, vector<1x128xf32>
    %11 = vector.broadcast %10 : vector<1x128xf32> to vector<8x128xf32>
    %12 = arith.addf %9, %11 : vector<8x128xf32>
    %c0_11 = arith.constant 0 : index
    %c0_12 = arith.constant 0 : index
    %13 = vector.load %arg6[%c0_11, %c0_12] : memref<8x128xf32, #tpu.memory_space<vmem>>, vector<8x128xf32>
    tpu.vector_store %arg6[%c0_11, %c0_12], %12 {strides = array<i32>} : memref<8x128xf32, #tpu.memory_space<vmem>>, vector<8x128xf32>,
    return
  }
  func.func @transform_0(%arg0: i32) -> (i32, i32) {
    %c0_i32 = arith.constant 0 : i32
    %c0_i32_0 = arith.constant 0 : i32
    return %arg0, %c0_i32 : i32, i32
  }
  func.func @transform_1(%arg0: i32) -> (i32, i32) {
    %c0_i32 = arith.constant 0 : i32
    %c0_i32_0 = arith.constant 0 : i32
    %c0_i32_1 = arith.constant 0 : i32
    return %c0_i32, %c0_i32_0 : i32, i32
  }
  func.func @transform_2(%arg0: i32) -> (i32, i32) {
    %c0_i32 = arith.constant 0 : i32
    %c0_i32_0 = arith.constant 0 : i32
    %c0_i32_1 = arith.constant 0 : i32
    return %c0_i32, %c0_i32_0 : i32, i32
  }
  func.func @transform_3(%arg0: i32) -> (i32, i32) {
    %c0_i32 = arith.constant 0 : i32
    %c0_i32_0 = arith.constant 0 : i32
    %c0_i32_1 = arith.constant 0 : i32
    return %c0_i32, %c0_i32_0 : i32, i32
  }
  func.func @transform_4(%arg0: i32) -> (i32, i32) {
    %c0_i32 = arith.constant 0 : i32
    %c0_i32_0 = arith.constant 0 : i32
    %c0_i32_1 = arith.constant 0 : i32
    return %c0_i32, %c0_i32_0 : i32, i32
  }
  func.func @transform_5(%arg0: i32) -> (i32, i32) {
    %c0_i32 = arith.constant 0 : i32
    %c0_i32_0 = arith.constant 0 : i32
    return %arg0, %c0_i32 : i32, i32
  }
}

</mosaic_0001>

<llo_original>
// kernel: qnetwork_forward.1
$region0: #{qnetwork_forward.1}
  #allocation0 [shape = 'u32[]', space=smem, size = 0x4, offset = 0x4, fixed_abs, tag = 'smem constant byte address 0x4 - core index']
  #allocation1 [shape = 'u32[144,128]{1,0:T(1,128)}', space=vmem, size = 0x12000, scoped, tag = 'internal scratch']
  %s0 = inlined_call_operand.vmem [shape: f32[8,3], index: 0, kind: input, shape index: {}]
  %s1 = inlined_call_operand.vmem [shape: f32[3,32], index: 1, kind: input, shape index: {}]
  %s2 = inlined_call_operand.vmem [shape: f32[1,32], index: 2, kind: input, shape index: {}]
  %s3 = inlined_call_operand.hbm [shape: f32[32,128], index: 3, kind: input, shape index: {}]
  %s4 = inlined_call_operand.vmem [shape: f32[1,128], index: 4, kind: input, shape index: {}]
  %s5 = inlined_call_operand.vmem [shape: f32[8,128], index: 5, kind: output, shape index: {}]
  %s6 = sld [smem:[#allocation0]]
  $region34: #{qnetwork_forward.1} parent=0
    _
  %s8 = ssub.s32 1, %s6
  %s9 = scalar_select 0, %s8, %s6
  $region1: #{qnetwork_forward.1} parent=0
    #allocation2 [shape = 'u8[16384]{0}', space=vmem, size = 0x4000, scoped, tag = 'input window, operand 3, single buffered']
    #allocation3 [shape = 's32[1]{0}', space=sflag, size = 0x4, scoped, tag = 'scoped memory for qnetwork_forward.1']
    %10 = vsyncpa [#allocation3], 0
    // Predicated region
    $region2: #{qnetwork_forward.1} parent=1 // pred_check
      _
    $region3: #{qnetwork_forward.1} parent=1 // pred_check_branch
      %12 = sbr.rel (0) target = $region5
    $region4: #{qnetwork_forward.1} parent=1 // pred_region
      _
    $region5: #{qnetwork_forward.1} parent=1 // pred_fallthru
      _
    // Predicated region
    $region6: #{qnetwork_forward.1} parent=1 // pred_check
      _
    $region7: #{qnetwork_forward.1} parent=1 // pred_check_branch
      %14 = sbr.rel (0) target = $region9
    $region8: #{qnetwork_forward.1} parent=1 // pred_region
      _
    $region9: #{qnetwork_forward.1} parent=1 // pred_fallthru
      _
    // Predicated region
    $region10: #{qnetwork_forward.1} parent=1 // pred_check
      _
    $region11: #{qnetwork_forward.1} parent=1 // pred_check_branch
      %16 = sbr.rel (0) target = $region13
    $region12: #{qnetwork_forward.1} parent=1 // pred_region
      _
    $region13: #{qnetwork_forward.1} parent=1 // pred_fallthru
      _
    // Predicated region
    $region14: #{qnetwork_forward.1} parent=1 // pred_check
      _
    $region15: #{qnetwork_forward.1} parent=1 // pred_check_branch
      %18 = sbr.rel (0) target = $region17
    $region16: #{qnetwork_forward.1} parent=1 // pred_region
      %s20 = ssub.s32 512, 512
      %21 = vsyncadd [#allocation3], %s20
      %s22 = sshll.u32 [#allocation2], 4
      %s23 = int_to_ptr.vmem [resolvable:$true] %s22
      %28 = dma.hbm_to_vmem [thread:$0]  %s3, 512, %s23, [#allocation3], 128, 128, 8
    $region17: #{qnetwork_forward.1} parent=1 // pred_fallthru
      _
    // Predicated region
    $region18: #{qnetwork_forward.1} parent=1 // pred_check
      _
    $region19: #{qnetwork_forward.1} parent=1 // pred_check_branch
      %30 = sbr.rel (0) target = $region21
    $region20: #{qnetwork_forward.1} parent=1 // pred_region
      _
    $region21: #{qnetwork_forward.1} parent=1 // pred_fallthru
      _
    // Predicated region
    $region22: #{qnetwork_forward.1} parent=1 // pred_check
      _
    $region23: #{qnetwork_forward.1} parent=1 // pred_check_branch
      %32 = sbr.rel (0) target = $region25
    $region24: #{qnetwork_forward.1} parent=1 // pred_region
      %33 = dma.done [#allocation3], 512
    $region25: #{qnetwork_forward.1} parent=1 // pred_fallthru
      _
    %v34 = vld [vmem:[%s0] sm:$0xff]
    %v35 = vld [vmem:[%s1] sm:$0x7]
    %v36 = vld [vmem:[%s2] sm:$0x1]
    %v38 = vlaneseq
    %v39 = vshrl.u32 %v38, 7
    %v40 = vsub.s32 0, %v39
    %v41 = vrot.slane %v36, %v40
    %vm43 = vcmask 23552
    %v45 = vsel %vm43, %v34, 0
    %vm47 = vcmask 1042432
    %v49 = vsel %vm47, %v35, 0
    %51 = vmatprep.subr.mxu0 0.0
    %52 = vmatpush1.msra.mxu0 0.0
    %53 = vmatprep.subr.mxu0 0.0
    %54 = vmatpush1.msra.mxu0 0.0
    %55 = vmatprep.subr.mxu0 0.0
    %56 = vmatpush1.msra.mxu0 0.0
    %57 = vmatprep.subr.mxu0 0.0
    %58 = vmatpush1.msra.mxu0 0.0
    %59 = vmatprep.subr.mxu0 0.0
    %60 = vmatpush1.msra.mxu0 0.0
    %61 = vmatprep.subr.mxu0 0.0
    %62 = vmatpush1.msra.mxu0 0.0
    %63 = vmatprep.subr.mxu0 0.0
    %64 = vmatpush1.msra.mxu0 0.0
    %65 = vmatprep.subr.mxu0 0.0
    %66 = vmatpush1.msra.mxu0 0.0
    %67 = vmatprep.subr.mxu0 0.0
    %68 = vmatpush1.msra.mxu0 0.0
    %69 = vmatprep.subr.mxu0 0.0
    %70 = vmatpush1.msra.mxu0 0.0
    %71 = vmatprep.subr.mxu0 0.0
    %72 = vmatpush1.msra.mxu0 0.0
    %73 = vmatprep.subr.mxu0 0.0
    %74 = vmatpush1.msra.mxu0 0.0
    %75 = vmatprep.subr.mxu0 0.0
    %76 = vmatpush1.msra.mxu0 0.0
    %77 = vmatprep.subr.mxu0 0.0
    %78 = vmatpush1.msra.mxu0 0.0
    %79 = vmatprep.subr.mxu0 0.0
    %80 = vmatpush1.msra.mxu0 0.0
    %81 = vmatprep.subr.mxu0 0.0
    %82 = vmatpush1.msra.mxu0 %v49
    %83 = vmatprep.subr.mxu0 0.0
    %84 = vmatpush2.msra.mxu0 0.0
    %85 = vmatprep.subr.mxu0 0.0
    %86 = vmatpush2.msra.mxu0 0.0
    %87 = vmatprep.subr.mxu0 0.0
    %88 = vmatpush2.msra.mxu0 0.0
    %89 = vmatprep.subr.mxu0 0.0
    %90 = vmatpush2.msra.mxu0 0.0
    %91 = vmatprep.subr.mxu0 0.0
    %92 = vmatpush2.msra.mxu0 0.0
    %93 = vmatprep.subr.mxu0 0.0
    %94 = vmatpush2.msra.mxu0 0.0
    %95 = vmatprep.subr.mxu0 0.0
    %96 = vmatpush2.msra.mxu0 0.0
    %97 = vmatprep.subr.mxu0 0.0
    %98 = vmatpush2.msra.mxu0 0.0
    %99 = vmatprep.subr.mxu0 0.0
    %100 = vmatpush2.msra.mxu0 0.0
    %101 = vmatprep.subr.mxu0 0.0
    %102 = vmatpush2.msra.mxu0 0.0
    %103 = vmatprep.subr.mxu0 0.0
    %104 = vmatpush2.msra.mxu0 0.0
    %105 = vmatprep.subr.mxu0 0.0
    %106 = vmatpush2.msra.mxu0 0.0
    %107 = vmatprep.subr.mxu0 0.0
    %108 = vmatpush2.msra.mxu0 0.0
    %109 = vmatprep.subr.mxu0 0.0
    %110 = vmatpush2.msra.mxu0 0.0
    %111 = vmatprep.subr.mxu0 0.0
    %112 = vmatpush2.msra.mxu0 0.0
    %113 = vmatprep.subr.mxu0 0.0
    %114 = vmatpush2.msra.mxu0 0.0
    %115 = vmatprep.mubr.f32.mxu0 0.0
    %116 = vmatmul.mubr.f32.gmra.mxu0 %v45
    %v117 = vpop.f32.mrf.mxu0
    %v118 = vadd.f32 %v41, %v117
    %v119 = vpop.f32.mrf.mxu0
    %120 = vdwg.mxu0
    %v121 = vmax.f32 %v118, 0.0
    %v122 = vld [vmem:[#allocation2] sm:$0xff]
    %v123 = vld [vmem:[#allocation2 + $0x8] sm:$0xff]
    %v124 = vld [vmem:[#allocation2 + $0x10] sm:$0xff]
    %v125 = vld [vmem:[#allocation2 + $0x18] sm:$0xff]
    %v126 = vld [vmem:[%s4] sm:$0x1]
    %v128 = vlaneseq
    %v129 = vshrl.u32 %v128, 7
    %v130 = vsub.s32 0, %v129
    %v131 = vrot.slane %v126, %v130
    %vm133 = vcmask 261120
    %v135 = vsel %vm133, %v121, 0
    %137 = vmatprep.subr.mxu0 0.0
    %138 = vmatpush1.msra.mxu0 0.0
    %139 = vmatprep.subr.mxu0 0.0
    %140 = vmatpush1.msra.mxu0 0.0
    %141 = vmatprep.subr.mxu0 0.0
    %142 = vmatpush1.msra.mxu0 0.0
    %143 = vmatprep.subr.mxu0 0.0
    %144 = vmatpush1.msra.mxu0 0.0
    %145 = vmatprep.subr.mxu0 0.0
    %146 = vmatpush1.msra.mxu0 0.0
    %147 = vmatprep.subr.mxu0 0.0
    %148 = vmatpush1.msra.mxu0 0.0
    %149 = vmatprep.subr.mxu0 0.0
    %150 = vmatpush1.msra.mxu0 0.0
    %151 = vmatprep.subr.mxu0 0.0
    %152 = vmatpush1.msra.mxu0 0.0
    %153 = vmatprep.subr.mxu0 0.0
    %154 = vmatpush1.msra.mxu0 0.0
    %155 = vmatprep.subr.mxu0 0.0
    %156 = vmatpush1.msra.mxu0 0.0
    %157 = vmatprep.subr.mxu0 0.0
    %158 = vmatpush1.msra.mxu0 0.0
    %159 = vmatprep.subr.mxu0 0.0
    %160 = vmatpush1.msra.mxu0 0.0
    %161 = vmatprep.subr.mxu0 0.0
    %162 = vmatpush1.msra.mxu0 %v125
    %163 = vmatprep.subr.mxu0 0.0
    %164 = vmatpush1.msra.mxu0 %v124
    %165 = vmatprep.subr.mxu0 0.0
    %166 = vmatpush1.msra.mxu0 %v123
    %167 = vmatprep.subr.mxu0 0.0
    %168 = vmatpush1.msra.mxu0 %v122
    %169 = vmatprep.subr.mxu0 0.0
    %170 = vmatpush2.msra.mxu0 0.0
    %171 = vmatprep.subr.mxu0 0.0
    %172 = vmatpush2.msra.mxu0 0.0
    %173 = vmatprep.subr.mxu0 0.0
    %174 = vmatpush2.msra.mxu0 0.0
    %175 = vmatprep.subr.mxu0 0.0
    %176 = vmatpush2.msra.mxu0 0.0
    %177 = vmatprep.subr.mxu0 0.0
    %178 = vmatpush2.msra.mxu0 0.0
    %179 = vmatprep.subr.mxu0 0.0
    %180 = vmatpush2.msra.mxu0 0.0
    %181 = vmatprep.subr.mxu0 0.0
    %182 = vmatpush2.msra.mxu0 0.0
    %183 = vmatprep.subr.mxu0 0.0
    %184 = vmatpush2.msra.mxu0 0.0
    %185 = vmatprep.subr.mxu0 0.0
    %186 = vmatpush2.msra.mxu0 0.0
    %187 = vmatprep.subr.mxu0 0.0
    %188 = vmatpush2.msra.mxu0 0.0
    %189 = vmatprep.subr.mxu0 0.0
    %190 = vmatpush2.msra.mxu0 0.0
    %191 = vmatprep.subr.mxu0 0.0
    %192 = vmatpush2.msra.mxu0 0.0
    %193 = vmatprep.subr.mxu0 0.0
    %194 = vmatpush2.msra.mxu0 0.0
    %195 = vmatprep.subr.mxu0 0.0
    %196 = vmatpush2.msra.mxu0 0.0
    %197 = vmatprep.subr.mxu0 0.0
    %198 = vmatpush2.msra.mxu0 0.0
    %199 = vmatprep.subr.mxu0 0.0
    %200 = vmatpush2.msra.mxu0 0.0
    %201 = vmatprep.mubr.f32.mxu0 0.0
    %202 = vmatmul.mubr.f32.gmra.mxu0 %v135
    %v203 = vpop.f32.mrf.mxu0
    %v204 = vadd.f32 %v131, %v203
    %v205 = vpop.f32.mrf.mxu0
    %206 = vdwg.mxu0
    %207 = vst [vmem:[%s5] sm:$0xff] %v204
    // Predicated region
    $region26: #{qnetwork_forward.1} parent=1 // pred_check
      _
    $region27: #{qnetwork_forward.1} parent=1 // pred_check_branch
      %209 = sbr.rel (0) target = $region29
    $region28: #{qnetwork_forward.1} parent=1 // pred_region
      _
    $region29: #{qnetwork_forward.1} parent=1 // pred_fallthru
      _
    // Predicated region
    $region30: #{qnetwork_forward.1} parent=1 // pred_check
      _
    $region31: #{qnetwork_forward.1} parent=1 // pred_check_branch
      %211 = sbr.rel (0) target = $region33
    $region32: #{qnetwork_forward.1} parent=1 // pred_region
      _
    $region33: #{qnetwork_forward.1} parent=1 // pred_fallthru
      _
    %212 = vsyncpa [#allocation3], 1

</llo_original>
